<compile_context>
chip_gen: v5e
topology: v5e:2x2
jax: 0.10.0
libtpu: 0.0.40
codegen_flags: <defaults>
</compile_context>

<pallas_src>
import functools
import math

import jax
import jax.numpy as jnp
from jax import lax
from jax.experimental import pallas as pl
from jax.experimental.pallas import tpu as pltpu

_LANE = 128


def _round_up(x, m):
    return ((x + m - 1) // m) * m


def _gelu_exact(x):
    # torch F.gelu default: exact erf-based GELU (kept in f32).
    return 0.5 * x * (1.0 + lax.erf(x * jnp.float32(1.0 / math.sqrt(2.0))))


def _gelu_tanh(x):
    # tanh approximation: the transcendental goes to the EUP slot (otherwise
    # idle) instead of a multi-op VALU erf polynomial.
    c = jnp.float32(math.sqrt(2.0 / math.pi))
    return 0.5 * x * (1.0 + jnp.tanh(c * (x + jnp.float32(0.044715) * x * x * x)))


def mlp_h_kernel(x_ref, w1_ref, b1_ref, w2_ref, b2_ref,
                 w3_ref, b3_ref, w4t_ref, b4_ref, o_ref, *, approximate_gelu):
    gelu = _gelu_tanh if approximate_gelu else _gelu_exact

    def dense(h, w_ref, b_ref):
        # MXU matmul in the weights' dtype (bf16 by default, single pass) with
        # f32 accumulation; bias add and GELU stay in f32 (no bf16 VPU on v5e).
        return jnp.dot(h.astype(w_ref.dtype), w_ref[...],
                       preferred_element_type=jnp.float32) + b_ref[...]

    h = gelu(dense(x_ref[...], w1_ref, b1_ref))    # (tile_b, 128)   f32
    h = gelu(dense(h, w2_ref, b2_ref))             # (tile_b, 128)   f32
    h = gelu(dense(h, w3_ref, b3_ref))             # (tile_b, 1024)  f32
    # fc4 (out_features == 1): VPU multiply + XLU lane reduction instead of a
    # 1-of-256-column MXU matmul; written lane-dense as a (1, 1, tile_b) row
    # (dense stores) instead of a (tile_b, 1) column.
    row = jnp.sum(h * w4t_ref[...], axis=-1)       # (tile_b,)
    o_ref[...] = (row.reshape(o_ref.shape) + b4_ref[...]).astype(o_ref.dtype)


def _pad_to(a, rows, cols):
    return jnp.pad(a, ((0, rows - a.shape[0]), (0, cols - a.shape[1])))


def prepare_params(params, compute_dtype=jnp.bfloat16):
    """Pad tiny hidden dims (8, 16) to the 128-lane width and cast ONCE.
    Zero padding is bit-exact: gelu(0)=0 and the matching padded weight rows
    are zero, so padded lanes never contaminate real lanes.  fc4 stays f32
    (it runs on the VPU, not the MXU)."""
    (w1, b1), (w2, b2), (w3, b3), (w4, b4) = params
    cd = compute_dtype
    h1 = _round_up(w1.shape[1], _LANE)
    h2 = _round_up(w2.shape[1], _LANE)
    h3 = w3.shape[1]                      # 1024, already lane-aligned
    w1p = _pad_to(w1, w1.shape[0], h1).astype(cd)
    b1p = _pad_to(b1.reshape(1, -1), 1, h1).astype(jnp.float32)
    w2p = _pad_to(w2, h1, h2).astype(cd)
    b2p = _pad_to(b2.reshape(1, -1), 1, h2).astype(jnp.float32)
    w3p = _pad_to(w3, h2, h3).astype(cd)
    b3f = b3.reshape(1, -1).astype(jnp.float32)
    w4t = w4.reshape(1, h3).astype(jnp.float32)   # pre-cast: no in-kernel cast
    b4f = b4.reshape(1, 1, 1).astype(jnp.float32)
    return (w1p, b1p, w2p, b2p, w3p, b3f, w4t, b4f)


def _tensorcores_per_chip():
    """1 TC on v5e/v6e; 2 TCs (megacore-style grid sharding) on v7x/v4/v5p."""
    try:
        kind = jax.devices()[0].device_kind.lower()
    except Exception:
        return 1
    if "v7" in kind or "v4" in kind or "v5p" in kind:
        return 2
    return 1


def _choose_tile_b(B, n_cores):
    """Batch-tile heuristic (generation aware):
       * single-TC chips (v5e/v6e): the grid is a serial loop, so use one big
         sublane-aligned tile (up to 2048 rows) -- splitting only adds the
         ~0.35us/step overhead;
       * multi-TC chips (v7x): keep >= n_cores 'parallel' grid steps so every
         core gets a tile, but cap the tile at 1024 rows for the 64 MiB/TC VMEM."""
    if n_cores <= 1:
        return min(_round_up(B, 8), 2048)
    if B <= 16:
        return _round_up(B, 8)
    return min(_round_up(pl.cdiv(B, n_cores), 8), 1024)


def _full_spec(a):
    nd = a.ndim
    return pl.BlockSpec(a.shape, lambda i: (0,) * nd)


def make_mlp_h_forward(params, input_size, *, compute_dtype=jnp.bfloat16,
                       approximate_gelu=True, x_buffering=2):
    """Prepares (pads/casts) the weight pytree once and returns a forward fn.

    Weights (~150 KiB padded) live in VMEM as full-array blocks with constant
    index_maps, so they are DMA'd once and stay resident across grid steps.
    For peak HBM efficiency feed `x` already in `compute_dtype` (bf16)."""
    prepared = prepare_params(params, compute_dtype)
    n_cores = _tensorcores_per_chip()
    vmem_limit = (64 if n_cores <= 1 else 48) * 1024 * 1024
    kernel = functools.partial(mlp_h_kernel, approximate_gelu=approximate_gelu)

    def forward(x, tile_b=None):
        x2 = x.reshape(-1, input_size)          # torch .view(-1, input_size)
        if x2.dtype != compute_dtype:
            # NOTE: casting here is an extra HBM pass; cast at the producer.
            x2 = x2.astype(compute_dtype)
        B = x2.shape[0]
        tb = tile_b if tile_b is not None else _choose_tile_b(B, n_cores)
        n_steps = pl.cdiv(B, tb)                # ragged: partial last block

        x_spec_kw = {}
        if x_buffering > 2:
            # Deeper buffering knob if the x-tile DMA ever becomes exposed.
            x_spec_kw = dict(pipeline_mode=pl.Buffered(x_buffering))
        x_spec = pl.BlockSpec((tb, input_size), lambda i: (i, 0), **x_spec_kw)

        out = pl.pallas_call(
            kernel,
            out_shape=jax.ShapeDtypeStruct((n_steps, 1, tb), jnp.float32),
            grid=(n_steps,),
            in_specs=[x_spec] + [_full_spec(a) for a in prepared],
            out_specs=pl.BlockSpec((1, 1, tb), lambda i: (i, 0, 0)),
            compiler_params=pltpu.CompilerParams(
                dimension_semantics=("parallel",),
                vmem_limit_bytes=vmem_limit),
        )(x2, *prepared)
        # Rows past B in the last block are garbage (rows are independent);
        # they are discarded here -- no wrapper-side pad of x.
        return out.reshape(-1)[:B].reshape(B, 1)

    return forward


def init_params(key, input_size):
    """Deterministic init mimicking torch.nn.Linear (uniform +/- 1/sqrt(fan_in)).
    Weights stored as (in_features, out_features)."""
    dims = [input_size, 2 ** 3, 2 ** 4, 2 ** 10, 1]
    params = []
    for fan_in, fan_out in zip(dims[:-1], dims[1:]):
        key, kw, kb = jax.random.split(key, 3)
        bound = 1.0 / math.sqrt(fan_in)
        w = jax.random.uniform(kw, (fan_in, fan_out), jnp.float32, -bound, bound)
        b = jax.random.uniform(kb, (1, fan_out), jnp.float32, -bound, bound)
        params.append((w, b))
    return params


def reference_forward(x, params, input_size, *, compute_dtype=jnp.float32,
                      approximate_gelu=False):
    """Pure-JAX reference mirroring the kernel numerics: fc1-3 operands in
    compute_dtype with f32 accumulation, f32 bias/GELU, fc4 fully in f32."""
    gelu = _gelu_tanh if approximate_gelu else _gelu_exact
    *hidden, (w4, b4) = params
    h = x.reshape(-1, input_size).astype(compute_dtype)
    for w, b in hidden:
        h = jnp.dot(h.astype(compute_dtype), w.astype(compute_dtype),
                    preferred_element_type=jnp.float32) + b.astype(jnp.float32)
        h = gelu(h)
    return (jnp.dot(h, w4.astype(jnp.float32),
                    preferred_element_type=jnp.float32) + b4.astype(jnp.float32))


if __name__ == "__main__":
    input_size = 256
    key = jax.random.PRNGKey(0)
    key, kx = jax.random.split(key)
    # x: (2, 4, 16, 16) -> view(-1, 256) -> (8, 256)
    x = jax.random.normal(kx, (2, 4, 16, 16), jnp.float32)
    params = init_params(key, input_size)

    # 1) Default perf config: bf16 operands + tanh GELU (EUP), f32 accumulation.
    fwd_fast = make_mlp_h_forward(params, input_size)
    out_fast = jax.block_until_ready(fwd_fast(x))
    ref_fast = reference_forward(x, params, input_size,
                                 compute_dtype=jnp.bfloat16, approximate_gelu=True)
    assert out_fast.shape == (8, 1)
    assert jnp.allclose(out_fast, ref_fast, atol=2e-2, rtol=2e-2)

    # 2) Exact torch-semantics config: f32 operands + erf GELU.
    fwd_exact = make_mlp_h_forward(params, input_size,
                                   compute_dtype=jnp.float32,
                                   approximate_gelu=False)
    out_exact = jax.block_until_ready(fwd_exact(x))
    ref_exact = reference_forward(x, params, input_size,
                                  compute_dtype=jnp.float32,
                                  approximate_gelu=False)
    assert jnp.allclose(out_exact, ref_exact, atol=2e-4, rtol=2e-4)

    # 3) Ragged batch (300 rows), bf16 fed from the producer: exercises the
    #    partial last block (no wrapper pad) and the multi-step parallel grid
    #    on multi-TensorCore chips.
    key, kx2 = jax.random.split(key)
    x_big = jax.random.normal(kx2, (300, input_size), jnp.float32)
    x_big_bf16 = x_big.astype(jnp.bfloat16)
    out_big = jax.block_until_ready(fwd_fast(x_big_bf16))
    ref_big = reference_forward(x_big_bf16, params, input_size,
                                compute_dtype=jnp.bfloat16, approximate_gelu=True)
    assert out_big.shape == (300, 1)
    assert jnp.allclose(out_big, ref_big, atol=2e-2, rtol=2e-2)

    # 4) Same ragged batch through the exact path with a forced small tile
    #    (3 grid steps; last block has 44/128 valid rows) to validate the
    #    partial-block read/write semantics at tight tolerance.
    out_big_exact = jax.block_until_ready(fwd_exact(x_big, tile_b=128))
    ref_big_exact = reference_forward(x_big, params, input_size,
                                      compute_dtype=jnp.float32,
                                      approximate_gelu=False)
    assert jnp.allclose(out_big_exact, ref_big_exact, atol=2e-4, rtol=2e-4)

    print("KERNEL_OK")
</pallas_src>

<mosaic_0001>
module attributes {stable_mosaic.version = 11 : i64} {
  func.func @mlp_h_kernel(%arg0: i32, %arg1: memref<8x256xbf16, #tpu.memory_space<vmem>>, %arg2: memref<256x128xbf16, #tpu.memory_space<vmem>>, %arg3: memref<1x128xf32, #tpu.memory_space<vmem>>, %arg4: memref<128x128xbf16, #tpu.memory_space<vmem>>, %arg5: memref<1x128xf32, #tpu.memory_space<vmem>>, %arg6: memref<128x1024xbf16, #tpu.memory_space<vmem>>, %arg7: memref<1x1024xf32, #tpu.memory_space<vmem>>, %arg8: memref<1x1024xf32, #tpu.memory_space<vmem>>, %arg9: memref<1x1x1xf32, #tpu.memory_space<vmem>>, %arg10: memref<1x1x8xf32, #tpu.memory_space<vmem>>) attributes {dimension_semantics = [#tpu.dimension_semantics<parallel>], iteration_bounds = array<i64: 1>, scalar_prefetch = 0 : i64, scratch_operands = 0 : i64, tpu.core_type = #tpu.core_type<tc>, window_params = [{transform_indices = @transform_0, window_bounds = array<i64: 8, 256>}, {pipeline_mode = #tpu.pipeline_mode<synchronous>, transform_indices = @transform_1, window_bounds = array<i64: 256, 128>}, {pipeline_mode = #tpu.pipeline_mode<synchronous>, transform_indices = @transform_2, window_bounds = array<i64: 1, 128>}, {pipeline_mode = #tpu.pipeline_mode<synchronous>, transform_indices = @transform_3, window_bounds = array<i64: 128, 128>}, {pipeline_mode = #tpu.pipeline_mode<synchronous>, transform_indices = @transform_4, window_bounds = array<i64: 1, 128>}, {pipeline_mode = #tpu.pipeline_mode<synchronous>, transform_indices = @transform_5, window_bounds = array<i64: 128, 1024>}, {pipeline_mode = #tpu.pipeline_mode<synchronous>, transform_indices = @transform_6, window_bounds = array<i64: 1, 1024>}, {pipeline_mode = #tpu.pipeline_mode<synchronous>, transform_indices = @transform_7, window_bounds = array<i64: 1, 1024>}, {pipeline_mode = #tpu.pipeline_mode<synchronous>, transform_indices = @transform_8, window_bounds = array<i64: 1, 1, 1>}, {transform_indices = @transform_9, window_bounds = array<i64: 1, 1, 8>}]} {
    %c0 = arith.constant 0 : index
    %c0_0 = arith.constant 0 : index
    %0 = vector.load %arg1[%c0, %c0_0] : memref<8x256xbf16, #tpu.memory_space<vmem>>, vector<8x256xbf16>
    %c0_1 = arith.constant 0 : index
    %c0_2 = arith.constant 0 : index
    %1 = vector.load %arg2[%c0_1, %c0_2] : memref<256x128xbf16, #tpu.memory_space<vmem>>, vector<256x128xbf16>
    %cst = arith.constant dense<0.000000e+00> : vector<8x128xf32>
    %2 = tpu.matmul %0, %1, %cst {dimension_numbers = #tpu.dot_dimension_numbers<[1], [0], [0], [1], [0, 0, 1, 1], [], []>} : vector<8x256xbf16>, vector<256x128xbf16>, vector<8x128xf32> -> vector<8x128xf32>
    %c0_3 = arith.constant 0 : index
    %c0_4 = arith.constant 0 : index
    %3 = vector.load %arg3[%c0_3, %c0_4] : memref<1x128xf32, #tpu.memory_space<vmem>>, vector<1x128xf32>
    %4 = vector.broadcast %3 : vector<1x128xf32> to vector<8x128xf32>
    %5 = arith.addf %2, %4 : vector<8x128xf32>
    %cst_5 = arith.constant 5.000000e-01 : f32
    %6 = vector.broadcast %cst_5 : f32 to vector<8x128xf32>
    %7 = arith.mulf %6, %5 : vector<8x128xf32>
    %cst_6 = arith.constant 4.471500e-02 : f32
    %8 = vector.broadcast %cst_6 : f32 to vector<8x128xf32>
    %9 = arith.mulf %8, %5 : vector<8x128xf32>
    %10 = arith.mulf %9, %5 : vector<8x128xf32>
    %11 = arith.mulf %10, %5 : vector<8x128xf32>
    %12 = arith.addf %5, %11 : vector<8x128xf32>
    %cst_7 = arith.constant 0.797884583 : f32
    %13 = vector.broadcast %cst_7 : f32 to vector<8x128xf32>
    %14 = arith.mulf %13, %12 : vector<8x128xf32>
    %15 = math.tanh %14 : vector<8x128xf32>
    %cst_8 = arith.constant 1.000000e+00 : f32
    %16 = vector.broadcast %cst_8 : f32 to vector<8x128xf32>
    %17 = arith.addf %16, %15 : vector<8x128xf32>
    %18 = arith.mulf %7, %17 : vector<8x128xf32>
    %19 = arith.truncf %18 : vector<8x128xf32> to vector<8x128xbf16>
    %c0_9 = arith.constant 0 : index
    %c0_10 = arith.constant 0 : index
    %20 = vector.load %arg4[%c0_9, %c0_10] : memref<128x128xbf16, #tpu.memory_space<vmem>>, vector<128x128xbf16>
    %cst_11 = arith.constant dense<0.000000e+00> : vector<8x128xf32>
    %21 = tpu.matmul %19, %20, %cst_11 {dimension_numbers = #tpu.dot_dimension_numbers<[1], [0], [0], [1], [0, 0, 1, 1], [], []>} : vector<8x128xbf16>, vector<128x128xbf16>, vector<8x128xf32> -> vector<8x128xf32>
    %c0_12 = arith.constant 0 : index
    %c0_13 = arith.constant 0 : index
    %22 = vector.load %arg5[%c0_12, %c0_13] : memref<1x128xf32, #tpu.memory_space<vmem>>, vector<1x128xf32>
    %23 = vector.broadcast %22 : vector<1x128xf32> to vector<8x128xf32>
    %24 = arith.addf %21, %23 : vector<8x128xf32>
    %cst_14 = arith.constant 5.000000e-01 : f32
    %25 = vector.broadcast %cst_14 : f32 to vector<8x128xf32>
    %26 = arith.mulf %25, %24 : vector<8x128xf32>
    %cst_15 = arith.constant 4.471500e-02 : f32
    %27 = vector.broadcast %cst_15 : f32 to vector<8x128xf32>
    %28 = arith.mulf %27, %24 : vector<8x128xf32>
    %29 = arith.mulf %28, %24 : vector<8x128xf32>
    %30 = arith.mulf %29, %24 : vector<8x128xf32>
    %31 = arith.addf %24, %30 : vector<8x128xf32>
    %cst_16 = arith.constant 0.797884583 : f32
    %32 = vector.broadcast %cst_16 : f32 to vector<8x128xf32>
    %33 = arith.mulf %32, %31 : vector<8x128xf32>
    %34 = math.tanh %33 : vector<8x128xf32>
    %cst_17 = arith.constant 1.000000e+00 : f32
    %35 = vector.broadcast %cst_17 : f32 to vector<8x128xf32>
    %36 = arith.addf %35, %34 : vector<8x128xf32>
    %37 = arith.mulf %26, %36 : vector<8x128xf32>
    %38 = arith.truncf %37 : vector<8x128xf32> to vector<8x128xbf16>
    %c0_18 = arith.constant 0 : index
    %c0_19 = arith.constant 0 : index
    %39 = vector.load %arg6[%c0_18, %c0_19] : memref<128x1024xbf16, #tpu.memory_space<vmem>>, vector<128x1024xbf16>
    %cst_20 = arith.constant dense<0.000000e+00> : vector<8x1024xf32>
    %40 = tpu.matmul %38, %39, %cst_20 {dimension_numbers = #tpu.dot_dimension_numbers<[1], [0], [0], [1], [0, 0, 1, 1], [], []>} : vector<8x128xbf16>, vector<128x1024xbf16>, vector<8x1024xf32> -> vector<8x1024xf32>
    %c0_21 = arith.constant 0 : index
    %c0_22 = arith.constant 0 : index
    %41 = vector.load %arg7[%c0_21, %c0_22] : memref<1x1024xf32, #tpu.memory_space<vmem>>, vector<1x1024xf32>
    %42 = vector.broadcast %41 : vector<1x1024xf32> to vector<8x1024xf32>
    %43 = arith.addf %40, %42 : vector<8x1024xf32>
    %cst_23 = arith.constant 5.000000e-01 : f32
    %44 = vector.broadcast %cst_23 : f32 to vector<8x1024xf32>
    %45 = arith.mulf %44, %43 : vector<8x1024xf32>
    %cst_24 = arith.constant 4.471500e-02 : f32
    %46 = vector.broadcast %cst_24 : f32 to vector<8x1024xf32>
    %47 = arith.mulf %46, %43 : vector<8x1024xf32>
    %48 = arith.mulf %47, %43 : vector<8x1024xf32>
    %49 = arith.mulf %48, %43 : vector<8x1024xf32>
    %50 = arith.addf %43, %49 : vector<8x1024xf32>
    %cst_25 = arith.constant 0.797884583 : f32
    %51 = vector.broadcast %cst_25 : f32 to vector<8x1024xf32>
    %52 = arith.mulf %51, %50 : vector<8x1024xf32>
    %53 = math.tanh %52 : vector<8x1024xf32>
    %cst_26 = arith.constant 1.000000e+00 : f32
    %54 = vector.broadcast %cst_26 : f32 to vector<8x1024xf32>
    %55 = arith.addf %54, %53 : vector<8x1024xf32>
    %56 = arith.mulf %45, %55 : vector<8x1024xf32>
    %c0_27 = arith.constant 0 : index
    %c0_28 = arith.constant 0 : index
    %57 = vector.load %arg8[%c0_27, %c0_28] : memref<1x1024xf32, #tpu.memory_space<vmem>>, vector<1x1024xf32>
    %58 = vector.broadcast %57 : vector<1x1024xf32> to vector<8x1024xf32>
    %59 = arith.mulf %56, %58 : vector<8x1024xf32>
    %cst_29 = arith.constant dense<0.000000e+00> : vector<8xf32>
    %60 = vector.multi_reduction <add>, %59, %cst_29 [1] : vector<8x1024xf32> to vector<8xf32>
    %61 = vector.shape_cast %60 : vector<8xf32> to vector<1x1x8xf32>
    %c0_30 = arith.constant 0 : index
    %c0_31 = arith.constant 0 : index
    %c0_32 = arith.constant 0 : index
    %62 = vector.load %arg9[%c0_30, %c0_31, %c0_32] : memref<1x1x1xf32, #tpu.memory_space<vmem>>, vector<1x1x1xf32>
    %63 = vector.broadcast %62 : vector<1x1x1xf32> to vector<1x1x8xf32>
    %64 = arith.addf %61, %63 : vector<1x1x8xf32>
    %c0_33 = arith.constant 0 : index
    %c0_34 = arith.constant 0 : index
    %c0_35 = arith.constant 0 : index
    %65 = vector.load %arg10[%c0_33, %c0_34, %c0_35] : memref<1x1x8xf32, #tpu.memory_space<vmem>>, vector<1x1x8xf32>
    tpu.vector_store %arg10[%c0_33, %c0_34, %c0_35], %64 {strides = array<i32>} : memref<1x1x8xf32, #tpu.memory_space<vmem>>, vector<1x1x8xf32>,
    return
  }
  func.func @transform_0(%arg0: i32) -> (i32, i32) {
    %c0_i32 = arith.constant 0 : i32
    %c0_i32_0 = arith.constant 0 : i32
    return %arg0, %c0_i32 : i32, i32
  }
  func.func @transform_1(%arg0: i32) -> (i32, i32) {
    %c0_i32 = arith.constant 0 : i32
    %c0_i32_0 = arith.constant 0 : i32
    %c0_i32_1 = arith.constant 0 : i32
    return %c0_i32, %c0_i32_0 : i32, i32
  }
  func.func @transform_2(%arg0: i32) -> (i32, i32) {
    %c0_i32 = arith.constant 0 : i32
    %c0_i32_0 = arith.constant 0 : i32
    %c0_i32_1 = arith.constant 0 : i32
    return %c0_i32, %c0_i32_0 : i32, i32
  }
  func.func @transform_3(%arg0: i32) -> (i32, i32) {
    %c0_i32 = arith.constant 0 : i32
    %c0_i32_0 = arith.constant 0 : i32
    %c0_i32_1 = arith.constant 0 : i32
    return %c0_i32, %c0_i32_0 : i32, i32
  }
  func.func @transform_4(%arg0: i32) -> (i32, i32) {
    %c0_i32 = arith.constant 0 : i32
    %c0_i32_0 = arith.constant 0 : i32
    %c0_i32_1 = arith.constant 0 : i32
    return %c0_i32, %c0_i32_0 : i32, i32
  }
  func.func @transform_5(%arg0: i32) -> (i32, i32) {
    %c0_i32 = arith.constant 0 : i32
    %c0_i32_0 = arith.constant 0 : i32
    %c0_i32_1 = arith.constant 0 : i32
    return %c0_i32, %c0_i32_0 : i32, i32
  }
  func.func @transform_6(%arg0: i32) -> (i32, i32) {
    %c0_i32 = arith.constant 0 : i32
    %c0_i32_0 = arith.constant 0 : i32
    %c0_i32_1 = arith.constant 0 : i32
    return %c0_i32, %c0_i32_0 : i32, i32
  }
  func.func @transform_7(%arg0: i32) -> (i32, i32) {
    %c0_i32 = arith.constant 0 : i32
    %c0_i32_0 = arith.constant 0 : i32
    %c0_i32_1 = arith.constant 0 : i32
    return %c0_i32, %c0_i32_0 : i32, i32
  }
  func.func @transform_8(%arg0: i32) -> (i32, i32, i32) {
    %c0_i32 = arith.constant 0 : i32
    %c0_i32_0 = arith.constant 0 : i32
    %c0_i32_1 = arith.constant 0 : i32
    %c0_i32_2 = arith.constant 0 : i32
    return %c0_i32, %c0_i32_0, %c0_i32_1 : i32, i32, i32
  }
  func.func @transform_9(%arg0: i32) -> (i32, i32, i32) {
    %c0_i32 = arith.constant 0 : i32
    %c0_i32_0 = arith.constant 0 : i32
    %c0_i32_1 = arith.constant 0 : i32
    return %arg0, %c0_i32, %c0_i32_0 : i32, i32, i32
  }
}

</mosaic_0001>

<llo_original>
// kernel: tpu_custom_call.1
$region0: #{tpu_custom_call.1}
  #allocation0 [shape = 'u32[]', space=smem, size = 0x4, offset = 0x4, fixed_abs, tag = 'smem constant byte address 0x4 - core index']
  #allocation1 [shape = 'u32[72,128]{1,0:T(1,128)}', space=vmem, size = 0x9000, scoped, tag = 'internal scratch']
  #allocation2 [shape = 'f32[1,1,1]{2,1,0:T(1,128)S(1)}', space=vmem, size = 0x200, scoped, tag = 'scoped memory for tpu_custom_call.1']
  %s0 = inlined_call_operand.hbm [shape: bf16[8,256], index: 0, kind: input, shape index: {}]
  %s1 = inlined_call_operand.hbm [shape: bf16[256,128], index: 1, kind: input, shape index: {}]
  %s2 = inlined_call_operand.hbm [shape: f32[1,128], index: 2, kind: input, shape index: {}]
  %s3 = inlined_call_operand.hbm [shape: bf16[128,128], index: 3, kind: input, shape index: {}]
  %s4 = inlined_call_operand.hbm [shape: f32[1,128], index: 4, kind: input, shape index: {}]
  %s5 = inlined_call_operand.hbm [shape: bf16[128,1024], index: 5, kind: input, shape index: {}]
  %s6 = inlined_call_operand.hbm [shape: f32[1,1024], index: 6, kind: input, shape index: {}]
  %s7 = inlined_call_operand.vmem [shape: f32[1,1024], index: 7, kind: input, shape index: {}]
  %s8 = inlined_call_operand.<no memory space> [shape: f32[1,1,1], index: 8, kind: input, shape index: {}]
  %s9 = inlined_call_operand.hbm [shape: f32[1,1,8], index: 9, kind: output, shape index: {}]
  %s10 = sld [smem:[#allocation0]]
  $region74: #{tpu_custom_call.1} parent=0
    _
  %s12 = ssub.s32 1, %s10
  %s13 = scalar_select 0, %s12, %s10
  %v14 = vstv %s8
  %15 = vst [vmem:[#allocation2] sm:$0x1] %v14
  $region1: #{tpu_custom_call.1} parent=0
    #allocation3 [shape = 'u8[4096]{0}', space=vmem, size = 0x1000, scoped, tag = 'input window, operand 0, single buffered']
    #allocation4 [shape = 's32[1]{0}', space=sflag, size = 0x4, scoped, tag = 'scoped memory for tpu_custom_call.1']
    #allocation5 [shape = 's32[1]{0}', space=sflag, size = 0x4, scoped, tag = 'scoped memory for tpu_custom_call.1']
    #allocation6 [shape = 'u8[65536]{0}', space=vmem, size = 0x10000, scoped, tag = 'input window, operand 1, single buffered']
    #allocation7 [shape = 's32[1]{0}', space=sflag, size = 0x4, scoped, tag = 'scoped memory for tpu_custom_call.1']
    #allocation8 [shape = 'u8[512]{0}', space=vmem, size = 0x400, scoped, tag = 'input window, operand 2, single buffered']
    #allocation9 [shape = 'u8[32768]{0}', space=vmem, size = 0x8000, scoped, tag = 'input window, operand 3, single buffered']
    #allocation10 [shape = 's32[1]{0}', space=sflag, size = 0x4, scoped, tag = 'scoped memory for tpu_custom_call.1']
    #allocation11 [shape = 'u8[512]{0}', space=vmem, size = 0x400, scoped, tag = 'input window, operand 4, single buffered']
    #allocation12 [shape = 'u8[262144]{0}', space=vmem, size = 0x40000, scoped, tag = 'input window, operand 5, single buffered']
    #allocation13 [shape = 's32[1]{0}', space=sflag, size = 0x4, scoped, tag = 'scoped memory for tpu_custom_call.1']
    #allocation14 [shape = 'u8[4096]{0}', space=vmem, size = 0x1000, scoped, tag = 'input window, operand 6, single buffered']
    #allocation15 [shape = 'u8[512]{0}', space=vmem, size = 0x400, scoped, tag = 'output window, operand 0, single buffered']
    %16 = vsyncpa [#allocation4], 0
    %17 = vsyncpa [#allocation7], 0
    %18 = vsyncpa [#allocation10], 0
    %19 = vsyncpa [#allocation13], 0
    %20 = vsyncpa [#allocation5], 0
    // Predicated region
    $region2: #{tpu_custom_call.1} parent=1 // pred_check
      _
    $region3: #{tpu_custom_call.1} parent=1 // pred_check_branch
      %22 = sbr.rel (0) target = $region5
    $region4: #{tpu_custom_call.1} parent=1 // pred_region
      %24 = vsyncadd [#allocation4], 0
      %s26 = sshll.u32 %s0, 4
      %s27 = int_to_ptr.hbm [resolvable:$true] %s26
      %s28 = sshll.u32 [#allocation3], 4
      %s29 = int_to_ptr.vmem [resolvable:$true] %s28
      %31 = dma.hbm_to_vmem [thread:$0]  %s27, 128, %s29, [#allocation4]
    $region5: #{tpu_custom_call.1} parent=1 // pred_fallthru
      _
    // Predicated region
    $region6: #{tpu_custom_call.1} parent=1 // pred_check
      _
    $region7: #{tpu_custom_call.1} parent=1 // pred_check_branch
      %33 = sbr.rel (0) target = $region9
    $region8: #{tpu_custom_call.1} parent=1 // pred_region
      %35 = vsyncadd [#allocation7], 0
      %s36 = sshll.u32 %s1, 4
      %s37 = int_to_ptr.hbm [resolvable:$true] %s36
      %s38 = sshll.u32 [#allocation6], 4
      %s39 = int_to_ptr.vmem [resolvable:$true] %s38
      %44 = dma.hbm_to_vmem [thread:$0]  %s37, 2048, %s39, [#allocation7], 64, 64, 4
    $region9: #{tpu_custom_call.1} parent=1 // pred_fallthru
      _
    // Predicated region
    $region10: #{tpu_custom_call.1} parent=1 // pred_check
      _
    $region11: #{tpu_custom_call.1} parent=1 // pred_check_branch
      %46 = sbr.rel (0) target = $region13
    $region12: #{tpu_custom_call.1} parent=1 // pred_region
      %48 = vsyncadd [#allocation7], 0
      %s50 = sshll.u32 %s2, 4
      %s51 = int_to_ptr.hbm [resolvable:$true] %s50
      %s52 = sshll.u32 [#allocation8], 4
      %s53 = int_to_ptr.vmem [resolvable:$true] %s52
      %55 = dma.hbm_to_vmem [thread:$0]  %s51, 16, %s53, [#allocation7]
    $region13: #{tpu_custom_call.1} parent=1 // pred_fallthru
      _
    // Predicated region
    $region14: #{tpu_custom_call.1} parent=1 // pred_check
      _
    $region15: #{tpu_custom_call.1} parent=1 // pred_check_branch
      %57 = sbr.rel (0) target = $region17
    $region16: #{tpu_custom_call.1} parent=1 // pred_region
      %59 = vsyncadd [#allocation10], 0
      %s60 = sshll.u32 %s3, 4
      %s61 = int_to_ptr.hbm [resolvable:$true] %s60
      %s62 = sshll.u32 [#allocation9], 4
      %s63 = int_to_ptr.vmem [resolvable:$true] %s62
      %68 = dma.hbm_to_vmem [thread:$0]  %s61, 1024, %s63, [#allocation10], 64, 64, 4
    $region17: #{tpu_custom_call.1} parent=1 // pred_fallthru
      _
    // Predicated region
    $region18: #{tpu_custom_call.1} parent=1 // pred_check
      _
    $region19: #{tpu_custom_call.1} parent=1 // pred_check_branch
      %70 = sbr.rel (0) target = $region21
    $region20: #{tpu_custom_call.1} parent=1 // pred_region
      %72 = vsyncadd [#allocation10], 0
      %s74 = sshll.u32 %s4, 4
      %s75 = int_to_ptr.hbm [resolvable:$true] %s74
      %s76 = sshll.u32 [#allocation11], 4
      %s77 = int_to_ptr.vmem [resolvable:$true] %s76
      %79 = dma.hbm_to_vmem [thread:$0]  %s75, 16, %s77, [#allocation10]
    $region21: #{tpu_custom_call.1} parent=1 // pred_fallthru
      _
    // Predicated region
    $region22: #{tpu_custom_call.1} parent=1 // pred_check
      _
    $region23: #{tpu_custom_call.1} parent=1 // pred_check_branch
      %81 = sbr.rel (0) target = $region25
    $region24: #{tpu_custom_call.1} parent=1 // pred_region
      %83 = vsyncadd [#allocation13], 0
      %s84 = sshll.u32 %s5, 4
      %s85 = int_to_ptr.hbm [resolvable:$true] %s84
      %s86 = sshll.u32 [#allocation12], 4
      %s87 = int_to_ptr.vmem [resolvable:$true] %s86
      %92 = dma.hbm_to_vmem [thread:$0]  %s85, 8192, %s87, [#allocation13], 512, 512, 32
    $region25: #{tpu_custom_call.1} parent=1 // pred_fallthru
      _
    // Predicated region
    $region26: #{tpu_custom_call.1} parent=1 // pred_check
      _
    $region27: #{tpu_custom_call.1} parent=1 // pred_check_branch
      %94 = sbr.rel (0) target = $region29
    $region28: #{tpu_custom_call.1} parent=1 // pred_region
      %96 = vsyncadd [#allocation13], 0
      %s98 = sshll.u32 %s6, 4
      %s99 = int_to_ptr.hbm [resolvable:$true] %s98
      %s100 = sshll.u32 [#allocation14], 4
      %s101 = int_to_ptr.vmem [resolvable:$true] %s100
      %103 = dma.hbm_to_vmem [thread:$0]  %s99, 128, %s101, [#allocation13]
    $region29: #{tpu_custom_call.1} parent=1 // pred_fallthru
      _
    // Predicated region
    $region30: #{tpu_custom_call.1} parent=1 // pred_check
      _
    $region31: #{tpu_custom_call.1} parent=1 // pred_check_branch
      %105 = sbr.rel (0) target = $region33
    $region32: #{tpu_custom_call.1} parent=1 // pred_region
      _
    $region33: #{tpu_custom_call.1} parent=1 // pred_fallthru
      _
    // Predicated region
    $region34: #{tpu_custom_call.1} parent=1 // pred_check
      _
    $region35: #{tpu_custom_call.1} parent=1 // pred_check_branch
      %107 = sbr.rel (0) target = $region37
    $region36: #{tpu_custom_call.1} parent=1 // pred_region
      _
    $region37: #{tpu_custom_call.1} parent=1 // pred_fallthru
      _
    // Predicated region
    $region38: #{tpu_custom_call.1} parent=1 // pred_check
      _
    $region39: #{tpu_custom_call.1} parent=1 // pred_check_branch
      %109 = sbr.rel (0) target = $region41
    $region40: #{tpu_custom_call.1} parent=1 // pred_region
      %111 = dma.done [#allocation4], 128
    $region41: #{tpu_custom_call.1} parent=1 // pred_fallthru
      _
    // Predicated region
    $region42: #{tpu_custom_call.1} parent=1 // pred_check
      _
    $region43: #{tpu_custom_call.1} parent=1 // pred_check_branch
      %113 = sbr.rel (0) target = $region45
    $region44: #{tpu_custom_call.1} parent=1 // pred_region
      %115 = dma.done [#allocation7], 2048
    $region45: #{tpu_custom_call.1} parent=1 // pred_fallthru
      _
    // Predicated region
    $region46: #{tpu_custom_call.1} parent=1 // pred_check
      _
    $region47: #{tpu_custom_call.1} parent=1 // pred_check_branch
      %117 = sbr.rel (0) target = $region49
    $region48: #{tpu_custom_call.1} parent=1 // pred_region
      %119 = dma.done [#allocation7], 16
    $region49: #{tpu_custom_call.1} parent=1 // pred_fallthru
      _
    // Predicated region
    $region50: #{tpu_custom_call.1} parent=1 // pred_check
      _
    $region51: #{tpu_custom_call.1} parent=1 // pred_check_branch
      %121 = sbr.rel (0) target = $region53
    $region52: #{tpu_custom_call.1} parent=1 // pred_region
      %123 = dma.done [#allocation10], 1024
    $region53: #{tpu_custom_call.1} parent=1 // pred_fallthru
      _
    // Predicated region
    $region54: #{tpu_custom_call.1} parent=1 // pred_check
      _
    $region55: #{tpu_custom_call.1} parent=1 // pred_check_branch
      %125 = sbr.rel (0) target = $region57
    $region56: #{tpu_custom_call.1} parent=1 // pred_region
      %127 = dma.done [#allocation10], 16
    $region57: #{tpu_custom_call.1} parent=1 // pred_fallthru
      _
    // Predicated region
    $region58: #{tpu_custom_call.1} parent=1 // pred_check
      _
    $region59: #{tpu_custom_call.1} parent=1 // pred_check_branch
      %129 = sbr.rel (0) target = $region61
    $region60: #{tpu_custom_call.1} parent=1 // pred_region
      %131 = dma.done [#allocation13], 8192
    $region61: #{tpu_custom_call.1} parent=1 // pred_fallthru
      _
    // Predicated region
    $region62: #{tpu_custom_call.1} parent=1 // pred_check
      _
    $region63: #{tpu_custom_call.1} parent=1 // pred_check_branch
      %133 = sbr.rel (0) target = $region65
    $region64: #{tpu_custom_call.1} parent=1 // pred_region
      %135 = dma.done [#allocation13], 128
    $region65: #{tpu_custom_call.1} parent=1 // pred_fallthru
      _
    %v136 = vld [vmem:[#allocation3] sm:$0xff]
    %v137 = vld [vmem:[#allocation6] sm:$0xf]
    %v138 = vld [vmem:[#allocation6 + $0x4] sm:$0xf]
    %v139 = vld [vmem:[#allocation6 + $0x8] sm:$0xf]
    %v140 = vld [vmem:[#allocation6 + $0xc] sm:$0xf]
    %v141 = vld [vmem:[#allocation6 + $0x10] sm:$0xf]
    %v142 = vld [vmem:[#allocation6 + $0x14] sm:$0xf]
    %v143 = vld [vmem:[#allocation6 + $0x18] sm:$0xf]
    %v144 = vld [vmem:[#allocation6 + $0x1c] sm:$0xf]
    %v145 = vld [vmem:[#allocation6 + $0x20] sm:$0xf]
    %v146 = vld [vmem:[#allocation6 + $0x24] sm:$0xf]
    %v147 = vld [vmem:[#allocation6 + $0x28] sm:$0xf]
    %v148 = vld [vmem:[#allocation6 + $0x2c] sm:$0xf]
    %v149 = vld [vmem:[#allocation6 + $0x30] sm:$0xf]
    %v150 = vld [vmem:[#allocation6 + $0x34] sm:$0xf]
    %v151 = vld [vmem:[#allocation6 + $0x38] sm:$0xf]
    %v152 = vld [vmem:[#allocation6 + $0x3c] sm:$0xf]
    %v153 = vld [vmem:[#allocation6 + $0x40] sm:$0xf]
    %v154 = vld [vmem:[#allocation6 + $0x44] sm:$0xf]
    %v155 = vld [vmem:[#allocation6 + $0x48] sm:$0xf]
    %v156 = vld [vmem:[#allocation6 + $0x4c] sm:$0xf]
    %v157 = vld [vmem:[#allocation6 + $0x50] sm:$0xf]
    %v158 = vld [vmem:[#allocation6 + $0x54] sm:$0xf]
    %v159 = vld [vmem:[#allocation6 + $0x58] sm:$0xf]
    %v160 = vld [vmem:[#allocation6 + $0x5c] sm:$0xf]
    %v161 = vld [vmem:[#allocation6 + $0x60] sm:$0xf]
    %v162 = vld [vmem:[#allocation6 + $0x64] sm:$0xf]
    %v163 = vld [vmem:[#allocation6 + $0x68] sm:$0xf]
    %v164 = vld [vmem:[#allocation6 + $0x6c] sm:$0xf]
    %v165 = vld [vmem:[#allocation6 + $0x70] sm:$0xf]
    %v166 = vld [vmem:[#allocation6 + $0x74] sm:$0xf]
    %v167 = vld [vmem:[#allocation6 + $0x78] sm:$0xf]
    %v168 = vld [vmem:[#allocation6 + $0x7c] sm:$0xf]
    %v169 = vld [vmem:[#allocation8] sm:$0x1]
    %v171 = vperm.slane %v169, 0
    %v174 = vunpack.c.l.b16 %v136
    %v175 = vunpack.c.h.b16 %v136
    %v176 = vpack.c.b16 %v174, %v174
    %v177 = vpack.c.b16 %v175, %v175
    %v212 = vunpack.c.l.b16 %v137
    %v213 = vunpack.c.l.b16 %v138
    %v214 = vunpack.c.l.b16 %v139
    %v215 = vunpack.c.l.b16 %v140
    %v216 = vunpack.c.l.b16 %v141
    %v217 = vunpack.c.l.b16 %v142
    %v218 = vunpack.c.l.b16 %v143
    %v219 = vunpack.c.l.b16 %v144
    %v220 = vunpack.c.l.b16 %v145
    %v221 = vunpack.c.l.b16 %v146
    %v222 = vunpack.c.l.b16 %v147
    %v223 = vunpack.c.l.b16 %v148
    %v224 = vunpack.c.l.b16 %v149
    %v225 = vunpack.c.l.b16 %v150
    %v226 = vunpack.c.l.b16 %v151
    %v227 = vunpack.c.l.b16 %v152
    %v228 = vunpack.c.l.b16 %v153
    %v229 = vunpack.c.l.b16 %v154
    %v230 = vunpack.c.l.b16 %v155
    %v231 = vunpack.c.l.b16 %v156
    %v232 = vunpack.c.l.b16 %v157
    %v233 = vunpack.c.l.b16 %v158
    %v234 = vunpack.c.l.b16 %v159
    %v235 = vunpack.c.l.b16 %v160
    %v236 = vunpack.c.l.b16 %v161
    %v237 = vunpack.c.l.b16 %v162
    %v238 = vunpack.c.l.b16 %v163
    %v239 = vunpack.c.l.b16 %v164
    %v240 = vunpack.c.l.b16 %v165
    %v241 = vunpack.c.l.b16 %v166
    %v242 = vunpack.c.l.b16 %v167
    %v243 = vunpack.c.l.b16 %v168
    %v244 = vpack.c.b16 %v213, %v212
    %v245 = vpack.c.b16 %v215, %v214
    %v246 = vpack.c.b16 %v217, %v216
    %v247 = vpack.c.b16 %v219, %v218
    %v248 = vpack.c.b16 %v221, %v220
    %v249 = vpack.c.b16 %v223, %v222
    %v250 = vpack.c.b16 %v225, %v224
    %v251 = vpack.c.b16 %v227, %v226
    %v252 = vpack.c.b16 %v229, %v228
    %v253 = vpack.c.b16 %v231, %v230
    %v254 = vpack.c.b16 %v233, %v232
    %v255 = vpack.c.b16 %v235, %v234
    %v256 = vpack.c.b16 %v237, %v236
    %v257 = vpack.c.b16 %v239, %v238
    %v258 = vpack.c.b16 %v241, %v240
    %v259 = vpack.c.b16 %v243, %v242
    %276 = vmatpush.bf16.msra.mxu0 %v251
    %277 = vmatpush.bf16.msra.mxu0 %v250
    %278 = vmatpush.bf16.msra.mxu0 %v249
    %279 = vmatpush.bf16.msra.mxu0 %v248
    %280 = vmatpush.bf16.msra.mxu0 %v247
    %281 = vmatpush.bf16.msra.mxu0 %v246
    %282 = vmatpush.bf16.msra.mxu0 %v245
    %283 = vmatpush.bf16.msra.mxu0 %v244
    %284 = vmatmul.bf16.gmra.mxu0 %v176
    %v285 = vpop.f32.mrf.mxu0
    %v286 = vadd.f32 %v171, %v285
    %v287 = vpop.f32.mrf.mxu0
    %288 = vdwg.mxu0
    %289 = vmatpush.bf16.msra.mxu0 %v259
    %290 = vmatpush.bf16.msra.mxu0 %v258
    %291 = vmatpush.bf16.msra.mxu0 %v257
    %292 = vmatpush.bf16.msra.mxu0 %v256
    %293 = vmatpush.bf16.msra.mxu0 %v255
    %294 = vmatpush.bf16.msra.mxu0 %v254
    %295 = vmatpush.bf16.msra.mxu0 %v253
    %296 = vmatpush.bf16.msra.mxu0 %v252
    %297 = vmatmul.bf16.gmra.mxu0 %v177
    %v298 = vpop.f32.mrf.mxu0
    %v299 = vadd.f32 %v286, %v298
    %v300 = vpop.f32.mrf.mxu0
    %301 = vdwg.mxu0
    %v302 = vmul.f32 %v299, 0.5
    %v303 = vmul.f32 %v299, 0.044715
    %v304 = vmul.f32 %v303, %v299
    %v305 = vmul.f32 %v304, %v299
    %v306 = vadd.f32 %v299, %v305
    %v307 = vmul.f32 %v306, 0.7978846
    %v308 = vtanh.pop %v307
    %v309 = vadd.f32 %v308, 1.0
    %v310 = vmul.f32 %v302, %v309
    %v311 = vpack.c.bf16 %v310, %v310
    %v312 = vld [vmem:[#allocation9] sm:$0xf]
    %v313 = vld [vmem:[#allocation9 + $0x4] sm:$0xf]
    %v314 = vld [vmem:[#allocation9 + $0x8] sm:$0xf]
    %v315 = vld [vmem:[#allocation9 + $0xc] sm:$0xf]
    %v316 = vld [vmem:[#allocation9 + $0x10] sm:$0xf]
    %v317 = vld [vmem:[#allocation9 + $0x14] sm:$0xf]
    %v318 = vld [vmem:[#allocation9 + $0x18] sm:$0xf]
    %v319 = vld [vmem:[#allocation9 + $0x1c] sm:$0xf]
    %v320 = vld [vmem:[#allocation9 + $0x20] sm:$0xf]
    %v321 = vld [vmem:[#allocation9 + $0x24] sm:$0xf]
    %v322 = vld [vmem:[#allocation9 + $0x28] sm:$0xf]
    %v323 = vld [vmem:[#allocation9 + $0x2c] sm:$0xf]
    %v324 = vld [vmem:[#allocation9 + $0x30] sm:$0xf]
    %v325 = vld [vmem:[#allocation9 + $0x34] sm:$0xf]
    %v326 = vld [vmem:[#allocation9 + $0x38] sm:$0xf]
    %v327 = vld [vmem:[#allocation9 + $0x3c] sm:$0xf]
    %v328 = vld [vmem:[#allocation11] sm:$0x1]
    %v330 = vperm.slane %v328, 0
    %v348 = vunpack.c.l.b16 %v312
    %v349 = vunpack.c.l.b16 %v313
    %v350 = vunpack.c.l.b16 %v314
    %v351 = vunpack.c.l.b16 %v315
    %v352 = vunpack.c.l.b16 %v316
    %v353 = vunpack.c.l.b16 %v317
    %v354 = vunpack.c.l.b16 %v318
    %v355 = vunpack.c.l.b16 %v319
    %v356 = vunpack.c.l.b16 %v320
    %v357 = vunpack.c.l.b16 %v321
    %v358 = vunpack.c.l.b16 %v322
    %v359 = vunpack.c.l.b16 %v323
    %v360 = vunpack.c.l.b16 %v324
    %v361 = vunpack.c.l.b16 %v325
    %v362 = vunpack.c.l.b16 %v326
    %v363 = vunpack.c.l.b16 %v327
    %v364 = vpack.c.b16 %v349, %v348
    %v365 = vpack.c.b16 %v351, %v350
    %v366 = vpack.c.b16 %v353, %v352
    %v367 = vpack.c.b16 %v355, %v354
    %v368 = vpack.c.b16 %v357, %v356
    %v369 = vpack.c.b16 %v359, %v358
    %v370 = vpack.c.b16 %v361, %v360
    %v371 = vpack.c.b16 %v363, %v362
    %380 = vmatpush.bf16.msra.mxu0 %v371
    %381 = vmatpush.bf16.msra.mxu0 %v370
    %382 = vmatpush.bf16.msra.mxu0 %v369
    %383 = vmatpush.bf16.msra.mxu0 %v368
    %384 = vmatpush.bf16.msra.mxu0 %v367
    %385 = vmatpush.bf16.msra.mxu0 %v366
    %386 = vmatpush.bf16.msra.mxu0 %v365
    %387 = vmatpush.bf16.msra.mxu0 %v364
    %388 = vmatmul.bf16.gmra.mxu0 %v311
    %v389 = vpop.f32.mrf.mxu0
    %v390 = vadd.f32 %v330, %v389
    %v391 = vpop.f32.mrf.mxu0
    %392 = vdwg.mxu0
    %v393 = vmul.f32 %v390, 0.5
    %v394 = vmul.f32 %v390, 0.044715
    %v395 = vmul.f32 %v394, %v390
    %v396 = vmul.f32 %v395, %v390
    %v397 = vadd.f32 %v390, %v396
    %v398 = vmul.f32 %v397, 0.7978846
    %v399 = vtanh.pop %v398
    %v400 = vadd.f32 %v399, 1.0
    %v401 = vmul.f32 %v393, %v400
    %v402 = vpack.c.bf16 %v401, %v401
    %v403 = vld [vmem:[#allocation12] sm:$0xff]
    %v404 = vld [vmem:[#allocation12 + $0x8] sm:$0xff]
    %v405 = vld [vmem:[#allocation12 + $0x10] sm:$0xff]
    %v406 = vld [vmem:[#allocation12 + $0x18] sm:$0xff]
    %v407 = vld [vmem:[#allocation12 + $0x20] sm:$0xff]
    %v408 = vld [vmem:[#allocation12 + $0x28] sm:$0xff]
    %v409 = vld [vmem:[#allocation12 + $0x30] sm:$0xff]
    %v410 = vld [vmem:[#allocation12 + $0x38] sm:$0xff]
    %v411 = vld [vmem:[#allocation12 + $0x40] sm:$0xff]
    %v412 = vld [vmem:[#allocation12 + $0x48] sm:$0xff]
    %v413 = vld [vmem:[#allocation12 + $0x50] sm:$0xff]
    %v414 = vld [vmem:[#allocation12 + $0x58] sm:$0xff]
    %v415 = vld [vmem:[#allocation12 + $0x60] sm:$0xff]
    %v416 = vld [vmem:[#allocation12 + $0x68] sm:$0xff]
    %v417 = vld [vmem:[#allocation12 + $0x70] sm:$0xff]
    %v418 = vld [vmem:[#allocation12 + $0x78] sm:$0xff]
    %v419 = vld [vmem:[#allocation12 + $0x80] sm:$0xff]
    %v420 = vld [vmem:[#allocation12 + $0x88] sm:$0xff]
    %v421 = vld [vmem:[#allocation12 + $0x90] sm:$0xff]
    %v422 = vld [vmem:[#allocation12 + $0x98] sm:$0xff]
    %v423 = vld [vmem:[#allocation12 + $0xa0] sm:$0xff]
    %v424 = vld [vmem:[#allocation12 + $0xa8] sm:$0xff]
    %v425 = vld [vmem:[#allocation12 + $0xb0] sm:$0xff]
    %v426 = vld [vmem:[#allocation12 + $0xb8] sm:$0xff]
    %v427 = vld [vmem:[#allocation12 + $0xc0] sm:$0xff]
    %v428 = vld [vmem:[#allocation12 + $0xc8] sm:$0xff]
    %v429 = vld [vmem:[#allocation12 + $0xd0] sm:$0xff]
    %v430 = vld [vmem:[#allocation12 + $0xd8] sm:$0xff]
    %v431 = vld [vmem:[#allocation12 + $0xe0] sm:$0xff]
    %v432 = vld [vmem:[#allocation12 + $0xe8] sm:$0xff]
    %v433 = vld [vmem:[#allocation12 + $0xf0] sm:$0xff]
    %v434 = vld [vmem:[#allocation12 + $0xf8] sm:$0xff]
    %v435 = vld [vmem:[#allocation12 + $0x100] sm:$0xff]
    %v436 = vld [vmem:[#allocation12 + $0x108] sm:$0xff]
    %v437 = vld [vmem:[#allocation12 + $0x110] sm:$0xff]
    %v438 = vld [vmem:[#allocation12 + $0x118] sm:$0xff]
    %v439 = vld [vmem:[#allocation12 + $0x120] sm:$0xff]
    %v440 = vld [vmem:[#allocation12 + $0x128] sm:$0xff]
    %v441 = vld [vmem:[#allocation12 + $0x130] sm:$0xff]
    %v442 = vld [vmem:[#allocation12 + $0x138] sm:$0xff]
    %v443 = vld [vmem:[#allocation12 + $0x140] sm:$0xff]
    %v444 = vld [vmem:[#allocation12 + $0x148] sm:$0xff]
    %v445 = vld [vmem:[#allocation12 + $0x150] sm:$0xff]
    %v446 = vld [vmem:[#allocation12 + $0x158] sm:$0xff]
    %v447 = vld [vmem:[#allocation12 + $0x160] sm:$0xff]
    %v448 = vld [vmem:[#allocation12 + $0x168] sm:$0xff]
    %v449 = vld [vmem:[#allocation12 + $0x170] sm:$0xff]
    %v450 = vld [vmem:[#allocation12 + $0x178] sm:$0xff]
    %v451 = vld [vmem:[#allocation12 + $0x180] sm:$0xff]
    %v452 = vld [vmem:[#allocation12 + $0x188] sm:$0xff]
    %v453 = vld [vmem:[#allocation12 + $0x190] sm:$0xff]
    %v454 = vld [vmem:[#allocation12 + $0x198] sm:$0xff]
    %v455 = vld [vmem:[#allocation12 + $0x1a0] sm:$0xff]
    %v456 = vld [vmem:[#allocation12 + $0x1a8] sm:$0xff]
    %v457 = vld [vmem:[#allocation12 + $0x1b0] sm:$0xff]
    %v458 = vld [vmem:[#allocation12 + $0x1b8] sm:$0xff]
    %v459 = vld [vmem:[#allocation12 + $0x1c0] sm:$0xff]
    %v460 = vld [vmem:[#allocation12 + $0x1c8] sm:$0xff]
    %v461 = vld [vmem:[#allocation12 + $0x1d0] sm:$0xff]
    %v462 = vld [vmem:[#allocation12 + $0x1d8] sm:$0xff]
    %v463 = vld [vmem:[#allocation12 + $0x1e0] sm:$0xff]
    %v464 = vld [vmem:[#allocation12 + $0x1e8] sm:$0xff]
    %v465 = vld [vmem:[#allocation12 + $0x1f0] sm:$0xff]
    %v466 = vld [vmem:[#allocation12 + $0x1f8] sm:$0xff]
    %v467 = vld [vmem:[#allocation14] sm:$0xff]
    %v469 = vperm.slane %v467, 0
    %v470 = vperm.slane %v467, 1
    %v471 = vperm.slane %v467, 2
    %v472 = vperm.slane %v467, 3
    %v473 = vperm.slane %v467, 4
    %v474 = vperm.slane %v467, 5
    %v475 = vperm.slane %v467, 6
    %v476 = vperm.slane %v467, 7
    %v549 = vunpack.c.l.b16 %v403
    %v550 = vunpack.c.h.b16 %v403
    %v551 = vunpack.c.l.b16 %v404
    %v552 = vunpack.c.h.b16 %v404
    %v553 = vunpack.c.l.b16 %v405
    %v554 = vunpack.c.h.b16 %v405
    %v555 = vunpack.c.l.b16 %v406
    %v556 = vunpack.c.h.b16 %v406
    %v557 = vunpack.c.l.b16 %v407
    %v558 = vunpack.c.h.b16 %v407
    %v559 = vunpack.c.l.b16 %v408
    %v560 = vunpack.c.h.b16 %v408
    %v561 = vunpack.c.l.b16 %v409
    %v562 = vunpack.c.h.b16 %v409
    %v563 = vunpack.c.l.b16 %v410
    %v564 = vunpack.c.h.b16 %v410
    %v565 = vunpack.c.l.b16 %v411
    %v566 = vunpack.c.h.b16 %v411
    %v567 = vunpack.c.l.b16 %v412
    %v568 = vunpack.c.h.b16 %v412
    %v569 = vunpack.c.l.b16 %v413
    %v570 = vunpack.c.h.b16 %v413
    %v571 = vunpack.c.l.b16 %v414
    %v572 = vunpack.c.h.b16 %v414
    %v573 = vunpack.c.l.b16 %v415
    %v574 = vunpack.c.h.b16 %v415
    %v575 = vunpack.c.l.b16 %v416
    %v576 = vunpack.c.h.b16 %v416
    %v577 = vunpack.c.l.b16 %v417
    %v578 = vunpack.c.h.b16 %v417
    %v579 = vunpack.c.l.b16 %v418
    %v580 = vunpack.c.h.b16 %v418
    %v581 = vunpack.c.l.b16 %v419
    %v582 = vunpack.c.h.b16 %v419
    %v583 = vunpack.c.l.b16 %v420
    %v584 = vunpack.c.h.b16 %v420
    %v585 = vunpack.c.l.b16 %v421
    %v586 = vunpack.c.h.b16 %v421
    %v587 = vunpack.c.l.b16 %v422
    %v588 = vunpack.c.h.b16 %v422
    %v589 = vunpack.c.l.b16 %v423
    %v590 = vunpack.c.h.b16 %v423
    %v591 = vunpack.c.l.b16 %v424
    %v592 = vunpack.c.h.b16 %v424
    %v593 = vunpack.c.l.b16 %v425
    %v594 = vunpack.c.h.b16 %v425
    %v595 = vunpack.c.l.b16 %v426
    %v596 = vunpack.c.h.b16 %v426
    %v597 = vunpack.c.l.b16 %v427
    %v598 = vunpack.c.h.b16 %v427
    %v599 = vunpack.c.l.b16 %v428
    %v600 = vunpack.c.h.b16 %v428
    %v601 = vunpack.c.l.b16 %v429
    %v602 = vunpack.c.h.b16 %v429
    %v603 = vunpack.c.l.b16 %v430
    %v604 = vunpack.c.h.b16 %v430
    %v605 = vunpack.c.l.b16 %v431
    %v606 = vunpack.c.h.b16 %v431
    %v607 = vunpack.c.l.b16 %v432
    %v608 = vunpack.c.h.b16 %v432
    %v609 = vunpack.c.l.b16 %v433
    %v610 = vunpack.c.h.b16 %v433
    %v611 = vunpack.c.l.b16 %v434
    %v612 = vunpack.c.h.b16 %v434
    %v613 = vunpack.c.l.b16 %v435
    %v614 = vunpack.c.h.b16 %v435
    %v615 = vunpack.c.l.b16 %v436
    %v616 = vunpack.c.h.b16 %v436
    %v617 = vunpack.c.l.b16 %v437
    %v618 = vunpack.c.h.b16 %v437
    %v619 = vunpack.c.l.b16 %v438
    %v620 = vunpack.c.h.b16 %v438
    %v621 = vunpack.c.l.b16 %v439
    %v622 = vunpack.c.h.b16 %v439
    %v623 = vunpack.c.l.b16 %v440
    %v624 = vunpack.c.h.b16 %v440
    %v625 = vunpack.c.l.b16 %v441
    %v626 = vunpack.c.h.b16 %v441
    %v627 = vunpack.c.l.b16 %v442
    %v628 = vunpack.c.h.b16 %v442
    %v629 = vunpack.c.l.b16 %v443
    %v630 = vunpack.c.h.b16 %v443
    %v631 = vunpack.c.l.b16 %v444
    %v632 = vunpack.c.h.b16 %v444
    %v633 = vunpack.c.l.b16 %v445
    %v634 = vunpack.c.h.b16 %v445
    %v635 = vunpack.c.l.b16 %v446
    %v636 = vunpack.c.h.b16 %v446
    %v637 = vunpack.c.l.b16 %v447
    %v638 = vunpack.c.h.b16 %v447
    %v639 = vunpack.c.l.b16 %v448
    %v640 = vunpack.c.h.b16 %v448
    %v641 = vunpack.c.l.b16 %v449
    %v642 = vunpack.c.h.b16 %v449
    %v643 = vunpack.c.l.b16 %v450
    %v644 = vunpack.c.h.b16 %v450
    %v645 = vunpack.c.l.b16 %v451
    %v646 = vunpack.c.h.b16 %v451
    %v647 = vunpack.c.l.b16 %v452
    %v648 = vunpack.c.h.b16 %v452
    %v649 = vunpack.c.l.b16 %v453
    %v650 = vunpack.c.h.b16 %v453
    %v651 = vunpack.c.l.b16 %v454
    %v652 = vunpack.c.h.b16 %v454
    %v653 = vunpack.c.l.b16 %v455
    %v654 = vunpack.c.h.b16 %v455
    %v655 = vunpack.c.l.b16 %v456
    %v656 = vunpack.c.h.b16 %v456
    %v657 = vunpack.c.l.b16 %v457
    %v658 = vunpack.c.h.b16 %v457
    %v659 = vunpack.c.l.b16 %v458
    %v660 = vunpack.c.h.b16 %v458
    %v661 = vunpack.c.l.b16 %v459
    %v662 = vunpack.c.h.b16 %v459
    %v663 = vunpack.c.l.b16 %v460
    %v664 = vunpack.c.h.b16 %v460
    %v665 = vunpack.c.l.b16 %v461
    %v666 = vunpack.c.h.b16 %v461
    %v667 = vunpack.c.l.b16 %v462
    %v668 = vunpack.c.h.b16 %v462
    %v669 = vunpack.c.l.b16 %v463
    %v670 = vunpack.c.h.b16 %v463
    %v671 = vunpack.c.l.b16 %v464
    %v672 = vunpack.c.h.b16 %v464
    %v673 = vunpack.c.l.b16 %v465
    %v674 = vunpack.c.h.b16 %v465
    %v675 = vunpack.c.l.b16 %v466
    %v676 = vunpack.c.h.b16 %v466
    %v677 = vpack.c.b16 %v557, %v549
    %v678 = vpack.c.b16 %v558, %v550
    %v679 = vpack.c.b16 %v559, %v551
    %v680 = vpack.c.b16 %v560, %v552
    %v681 = vpack.c.b16 %v561, %v553
    %v682 = vpack.c.b16 %v562, %v554
    %v683 = vpack.c.b16 %v563, %v555
    %v684 = vpack.c.b16 %v564, %v556
    %v685 = vpack.c.b16 %v573, %v565
    %v686 = vpack.c.b16 %v574, %v566
    %v687 = vpack.c.b16 %v575, %v567
    %v688 = vpack.c.b16 %v576, %v568
    %v689 = vpack.c.b16 %v577, %v569
    %v690 = vpack.c.b16 %v578, %v570
    %v691 = vpack.c.b16 %v579, %v571
    %v692 = vpack.c.b16 %v580, %v572
    %v693 = vpack.c.b16 %v589, %v581
    %v694 = vpack.c.b16 %v590, %v582
    %v695 = vpack.c.b16 %v591, %v583
    %v696 = vpack.c.b16 %v592, %v584
    %v697 = vpack.c.b16 %v593, %v585
    %v698 = vpack.c.b16 %v594, %v586
    %v699 = vpack.c.b16 %v595, %v587
    %v700 = vpack.c.b16 %v596, %v588
    %v701 = vpack.c.b16 %v605, %v597
    %v702 = vpack.c.b16 %v606, %v598
    %v703 = vpack.c.b16 %v607, %v599
    %v704 = vpack.c.b16 %v608, %v600
    %v705 = vpack.c.b16 %v609, %v601
    %v706 = vpack.c.b16 %v610, %v602
    %v707 = vpack.c.b16 %v611, %v603
    %v708 = vpack.c.b16 %v612, %v604
    %v709 = vpack.c.b16 %v621, %v613
    %v710 = vpack.c.b16 %v622, %v614
    %v711 = vpack.c.b16 %v623, %v615
    %v712 = vpack.c.b16 %v624, %v616
    %v713 = vpack.c.b16 %v625, %v617
    %v714 = vpack.c.b16 %v626, %v618
    %v715 = vpack.c.b16 %v627, %v619
    %v716 = vpack.c.b16 %v628, %v620
    %v717 = vpack.c.b16 %v637, %v629
    %v718 = vpack.c.b16 %v638, %v630
    %v719 = vpack.c.b16 %v639, %v631
    %v720 = vpack.c.b16 %v640, %v632
    %v721 = vpack.c.b16 %v641, %v633
    %v722 = vpack.c.b16 %v642, %v634
    %v723 = vpack.c.b16 %v643, %v635
    %v724 = vpack.c.b16 %v644, %v636
    %v725 = vpack.c.b16 %v653, %v645
    %v726 = vpack.c.b16 %v654, %v646
    %v727 = vpack.c.b16 %v655, %v647
    %v728 = vpack.c.b16 %v656, %v648
    %v729 = vpack.c.b16 %v657, %v649
    %v730 = vpack.c.b16 %v658, %v650
    %v731 = vpack.c.b16 %v659, %v651
    %v732 = vpack.c.b16 %v660, %v652
    %v733 = vpack.c.b16 %v669, %v661
    %v734 = vpack.c.b16 %v670, %v662
    %v735 = vpack.c.b16 %v671, %v663
    %v736 = vpack.c.b16 %v672, %v664
    %v737 = vpack.c.b16 %v673, %v665
    %v738 = vpack.c.b16 %v674, %v666
    %v739 = vpack.c.b16 %v675, %v667
    %v740 = vpack.c.b16 %v676, %v668
    %805 = vmatpush.bf16.msra.mxu0 %v733
    %806 = vmatpush.bf16.msra.mxu0 %v725
    %807 = vmatpush.bf16.msra.mxu0 %v717
    %808 = vmatpush.bf16.msra.mxu0 %v709
    %809 = vmatpush.bf16.msra.mxu0 %v701
    %810 = vmatpush.bf16.msra.mxu0 %v693
    %811 = vmatpush.bf16.msra.mxu0 %v685
    %812 = vmatpush.bf16.msra.mxu0 %v677
    %813 = vmatmul.bf16.gmra.mxu0 %v402
    %v814 = vpop.f32.mrf.mxu0
    %v815 = vadd.f32 %v469, %v814
    %v816 = vpop.f32.mrf.mxu0
    %817 = vdwg.mxu0
    %818 = vmatpush.bf16.msra.mxu0 %v734
    %819 = vmatpush.bf16.msra.mxu0 %v726
    %820 = vmatpush.bf16.msra.mxu0 %v718
    %821 = vmatpush.bf16.msra.mxu0 %v710
    %822 = vmatpush.bf16.msra.mxu0 %v702
    %823 = vmatpush.bf16.msra.mxu0 %v694
    %824 = vmatpush.bf16.msra.mxu0 %v686
    %825 = vmatpush.bf16.msra.mxu0 %v678
    %826 = vmatmul.bf16.gmra.mxu0 %v402
    %v827 = vpop.f32.mrf.mxu0
    %v828 = vadd.f32 %v470, %v827
    %v829 = vpop.f32.mrf.mxu0
    %830 = vdwg.mxu0
    %831 = vmatpush.bf16.msra.mxu0 %v735
    %832 = vmatpush.bf16.msra.mxu0 %v727
    %833 = vmatpush.bf16.msra.mxu0 %v719
    %834 = vmatpush.bf16.msra.mxu0 %v711
    %835 = vmatpush.bf16.msra.mxu0 %v703
    %836 = vmatpush.bf16.msra.mxu0 %v695
    %837 = vmatpush.bf16.msra.mxu0 %v687
    %838 = vmatpush.bf16.msra.mxu0 %v679
    %839 = vmatmul.bf16.gmra.mxu0 %v402
    %v840 = vpop.f32.mrf.mxu0
    %v841 = vadd.f32 %v471, %v840
    %v842 = vpop.f32.mrf.mxu0
    %843 = vdwg.mxu0
    %844 = vmatpush.bf16.msra.mxu0 %v736
    %845 = vmatpush.bf16.msra.mxu0 %v728
    %846 = vmatpush.bf16.msra.mxu0 %v720
    %847 = vmatpush.bf16.msra.mxu0 %v712
    %848 = vmatpush.bf16.msra.mxu0 %v704
    %849 = vmatpush.bf16.msra.mxu0 %v696
    %850 = vmatpush.bf16.msra.mxu0 %v688
    %851 = vmatpush.bf16.msra.mxu0 %v680
    %852 = vmatmul.bf16.gmra.mxu0 %v402
    %v853 = vpop.f32.mrf.mxu0
    %v854 = vadd.f32 %v472, %v853
    %v855 = vpop.f32.mrf.mxu0
    %856 = vdwg.mxu0
    %857 = vmatpush.bf16.msra.mxu0 %v737
    %858 = vmatpush.bf16.msra.mxu0 %v729
    %859 = vmatpush.bf16.msra.mxu0 %v721
    %860 = vmatpush.bf16.msra.mxu0 %v713
    %861 = vmatpush.bf16.msra.mxu0 %v705
    %862 = vmatpush.bf16.msra.mxu0 %v697
    %863 = vmatpush.bf16.msra.mxu0 %v689
    %864 = vmatpush.bf16.msra.mxu0 %v681
    %865 = vmatmul.bf16.gmra.mxu0 %v402
    %v866 = vpop.f32.mrf.mxu0
    %v867 = vadd.f32 %v473, %v866
    %v868 = vpop.f32.mrf.mxu0
    %869 = vdwg.mxu0
    %870 = vmatpush.bf16.msra.mxu0 %v738
    %871 = vmatpush.bf16.msra.mxu0 %v730
    %872 = vmatpush.bf16.msra.mxu0 %v722
    %873 = vmatpush.bf16.msra.mxu0 %v714
    %874 = vmatpush.bf16.msra.mxu0 %v706
    %875 = vmatpush.bf16.msra.mxu0 %v698
    %876 = vmatpush.bf16.msra.mxu0 %v690
    %877 = vmatpush.bf16.msra.mxu0 %v682
    %878 = vmatmul.bf16.gmra.mxu0 %v402
    %v879 = vpop.f32.mrf.mxu0
    %v880 = vadd.f32 %v474, %v879
    %v881 = vpop.f32.mrf.mxu0
    %882 = vdwg.mxu0
    %883 = vmatpush.bf16.msra.mxu0 %v739
    %884 = vmatpush.bf16.msra.mxu0 %v731
    %885 = vmatpush.bf16.msra.mxu0 %v723
    %886 = vmatpush.bf16.msra.mxu0 %v715
    %887 = vmatpush.bf16.msra.mxu0 %v707
    %888 = vmatpush.bf16.msra.mxu0 %v699
    %889 = vmatpush.bf16.msra.mxu0 %v691
    %890 = vmatpush.bf16.msra.mxu0 %v683
    %891 = vmatmul.bf16.gmra.mxu0 %v402
    %v892 = vpop.f32.mrf.mxu0
    %v893 = vadd.f32 %v475, %v892
    %v894 = vpop.f32.mrf.mxu0
    %895 = vdwg.mxu0
    %896 = vmatpush.bf16.msra.mxu0 %v740
    %897 = vmatpush.bf16.msra.mxu0 %v732
    %898 = vmatpush.bf16.msra.mxu0 %v724
    %899 = vmatpush.bf16.msra.mxu0 %v716
    %900 = vmatpush.bf16.msra.mxu0 %v708
    %901 = vmatpush.bf16.msra.mxu0 %v700
    %902 = vmatpush.bf16.msra.mxu0 %v692
    %903 = vmatpush.bf16.msra.mxu0 %v684
    %904 = vmatmul.bf16.gmra.mxu0 %v402
    %v905 = vpop.f32.mrf.mxu0
    %v906 = vadd.f32 %v476, %v905
    %v907 = vpop.f32.mrf.mxu0
    %908 = vdwg.mxu0
    %v909 = vmul.f32 %v815, 0.5
    %v910 = vmul.f32 %v828, 0.5
    %v911 = vmul.f32 %v841, 0.5
    %v912 = vmul.f32 %v854, 0.5
    %v913 = vmul.f32 %v867, 0.5
    %v914 = vmul.f32 %v880, 0.5
    %v915 = vmul.f32 %v893, 0.5
    %v916 = vmul.f32 %v906, 0.5
    %v917 = vmul.f32 %v815, 0.044715
    %v918 = vmul.f32 %v828, 0.044715
    %v919 = vmul.f32 %v841, 0.044715
    %v920 = vmul.f32 %v854, 0.044715
    %v921 = vmul.f32 %v867, 0.044715
    %v922 = vmul.f32 %v880, 0.044715
    %v923 = vmul.f32 %v893, 0.044715
    %v924 = vmul.f32 %v906, 0.044715
    %v925 = vmul.f32 %v917, %v815
    %v926 = vmul.f32 %v918, %v828
    %v927 = vmul.f32 %v919, %v841
    %v928 = vmul.f32 %v920, %v854
    %v929 = vmul.f32 %v921, %v867
    %v930 = vmul.f32 %v922, %v880
    %v931 = vmul.f32 %v923, %v893
    %v932 = vmul.f32 %v924, %v906
    %v933 = vmul.f32 %v925, %v815
    %v934 = vmul.f32 %v926, %v828
    %v935 = vmul.f32 %v927, %v841
    %v936 = vmul.f32 %v928, %v854
    %v937 = vmul.f32 %v929, %v867
    %v938 = vmul.f32 %v930, %v880
    %v939 = vmul.f32 %v931, %v893
    %v940 = vmul.f32 %v932, %v906
    %v941 = vadd.f32 %v815, %v933
    %v942 = vadd.f32 %v828, %v934
    %v943 = vadd.f32 %v841, %v935
    %v944 = vadd.f32 %v854, %v936
    %v945 = vadd.f32 %v867, %v937
    %v946 = vadd.f32 %v880, %v938
    %v947 = vadd.f32 %v893, %v939
    %v948 = vadd.f32 %v906, %v940
    %v949 = vmul.f32 %v941, 0.7978846
    %v950 = vmul.f32 %v942, 0.7978846
    %v951 = vmul.f32 %v943, 0.7978846
    %v952 = vmul.f32 %v944, 0.7978846
    %v953 = vmul.f32 %v945, 0.7978846
    %v954 = vmul.f32 %v946, 0.7978846
    %v955 = vmul.f32 %v947, 0.7978846
    %v956 = vmul.f32 %v948, 0.7978846
    %v957 = vtanh.pop %v949
    %v958 = vtanh.pop %v950
    %v959 = vtanh.pop %v951
    %v960 = vtanh.pop %v952
    %v961 = vtanh.pop %v953
    %v962 = vtanh.pop %v954
    %v963 = vtanh.pop %v955
    %v964 = vtanh.pop %v956
    %v965 = vadd.f32 %v957, 1.0
    %v966 = vadd.f32 %v958, 1.0
    %v967 = vadd.f32 %v959, 1.0
    %v968 = vadd.f32 %v960, 1.0
    %v969 = vadd.f32 %v961, 1.0
    %v970 = vadd.f32 %v962, 1.0
    %v971 = vadd.f32 %v963, 1.0
    %v972 = vadd.f32 %v964, 1.0
    %v973 = vmul.f32 %v909, %v965
    %v974 = vmul.f32 %v910, %v966
    %v975 = vmul.f32 %v911, %v967
    %v976 = vmul.f32 %v912, %v968
    %v977 = vmul.f32 %v913, %v969
    %v978 = vmul.f32 %v914, %v970
    %v979 = vmul.f32 %v915, %v971
    %v980 = vmul.f32 %v916, %v972
    %v981 = vld [vmem:[%s7] sm:$0xff]
    %v983 = vperm.slane %v981, 0
    %v984 = vperm.slane %v981, 1
    %v985 = vperm.slane %v981, 2
    %v986 = vperm.slane %v981, 3
    %v987 = vperm.slane %v981, 4
    %v988 = vperm.slane %v981, 5
    %v989 = vperm.slane %v981, 6
    %v990 = vperm.slane %v981, 7
    %v999 = vmul.f32 %v973, %v983
    %v1000 = vmul.f32 %v974, %v984
    %v1001 = vmul.f32 %v975, %v985
    %v1002 = vmul.f32 %v976, %v986
    %v1003 = vmul.f32 %v977, %v987
    %v1004 = vmul.f32 %v978, %v988
    %v1005 = vmul.f32 %v979, %v989
    %v1006 = vmul.f32 %v980, %v990
    %v1007 = vadd.f32 %v999, %v1000
    %v1008 = vadd.f32 %v1007, %v1001
    %v1009 = vadd.f32 %v1008, %v1002
    %v1010 = vadd.f32 %v1009, %v1003
    %v1011 = vadd.f32 %v1010, %v1004
    %v1012 = vadd.f32 %v1011, %v1005
    %v1013 = vadd.f32 %v1012, %v1006
    %1014 = vadd.xlane.f32.xlu0 %v1013
    %v1015 = vpop.xlane.xlu0 %1014
    %v1016 = vld [vmem:[#allocation2] sm:$0x1]
    %1018 = vset.pattern.permute.xlu0 0
    %1019 = vperm.xlu0 %1018, %v1016
    %v1020 = vpop.permute.xlu0 %1019
    %v1022 = vperm.slane %v1020, 0
    %v1023 = vadd.f32 %v1015, %v1022
    %v1025 = vlaneseq
    %v1026 = vand.u32 %v1025, 127
    %v1027 = vperm.slane %v1023, %v1026
    %vm1029 = vcmask 57344
    %1030 = vst.msk [vmem:[#allocation15] sm:$0x1] %vm1029, %v1027
    // Predicated region
    $region66: #{tpu_custom_call.1} parent=1 // pred_check
      _
    $region67: #{tpu_custom_call.1} parent=1 // pred_check_branch
      %1032 = sbr.rel (0) target = $region69
    $region68: #{tpu_custom_call.1} parent=1 // pred_region
      %1034 = vsyncadd [#allocation5], 0
      %s1036 = sshll.u32 [#allocation15], 4
      %s1037 = int_to_ptr.vmem [resolvable:$true] %s1036
      %s1038 = sshll.u32 %s9, 4
      %s1039 = int_to_ptr.hbm [resolvable:$true] %s1038
      %1041 = dma.vmem_to_hbm [thread:$0]  %s1037, 16, %s1039, [#allocation5]
    $region69: #{tpu_custom_call.1} parent=1 // pred_fallthru
      _
    // Predicated region
    $region70: #{tpu_custom_call.1} parent=1 // pred_check
      _
    $region71: #{tpu_custom_call.1} parent=1 // pred_check_branch
      %1043 = sbr.rel (0) target = $region73
    $region72: #{tpu_custom_call.1} parent=1 // pred_region
      %1045 = dma.done [#allocation5], 16
    $region73: #{tpu_custom_call.1} parent=1 // pred_fallthru
      _
    %1046 = vsyncpa [#allocation4], 1
    %1047 = vsyncpa [#allocation7], 1
    %1048 = vsyncpa [#allocation10], 1
    %1049 = vsyncpa [#allocation13], 1
    %1050 = vsyncpa [#allocation5], 1

</llo_original>
